<compile_context>
chip_gen: v6e
topology: v6e:2x2x1
jax: 0.10.0
libtpu: 0.0.40
codegen_flags: <defaults>
</compile_context>

<pallas_src>
import numpy as np
import jax
import jax.numpy as jnp
from jax.experimental import pallas as pl
from jax.experimental.pallas import tpu as pltpu

# ResidualTCN hyper-parameters (PyTorch defaults).
K_POOL, S_POOL = 2, 2
K_CONV, S_CONV = 5, 1
LANE_TARGET = 128          # pack batch elements into lanes until this width


# ----------------------------------------------------------------------------
# Host-side parameter preparation (pure numpy / JAX glue)
# ----------------------------------------------------------------------------
def init_params(key, time_len, out_dim, in_chan, out_chan):
    t_pool = (time_len - K_POOL) // S_POOL + 1
    t_conv = (t_pool - K_CONV) // S_CONV + 1
    in_fc = t_conv * out_chan
    k1, k2, k3, k4 = jax.random.split(key, 4)
    return {
        "conv_w": 0.1 * jax.random.normal(k1, (out_chan, in_chan, K_CONV), jnp.float32),
        "conv_b": 0.1 * jax.random.normal(k2, (out_chan,), jnp.float32),
        "fc_w":   0.1 * jax.random.normal(k3, (out_dim, in_fc), jnp.float32),
        "fc_b":   0.1 * jax.random.normal(k4, (out_dim,), jnp.float32),
    }


def pooled_conv_band_matrix(conv_w, time_len):
    """Band matrix M so that the (K_CONV,1) stride-1 'valid' conv applied to the
    (2,1)/(2,1) max-pooled input equals  M @ z,  where
        z[r, :] = max(x_flat[r, :], x_flat[r+1, :]),   r in [0, in_chan*T - 2]
    and x_flat row index is ci*T + t.  The stride-2 pool subsampling is folded
    into the column indices:  M[co*t_conv + t, ci*T + 2*(t+dk)] = w[co, ci, dk]."""
    c_out, c_in, k = conv_w.shape
    t_pool = (time_len - K_POOL) // S_POOL + 1
    t_conv = (t_pool - k) // S_CONV + 1
    co, t, ci, dk = np.meshgrid(np.arange(c_out), np.arange(t_conv),
                                np.arange(c_in), np.arange(k), indexing="ij")
    rows = (co * t_conv + t).ravel()
    cols = (ci * time_len + S_POOL * (S_CONV * t + dk)).ravel()
    w_np = np.asarray(conv_w)
    m = np.zeros((c_out * t_conv, c_in * time_len - 1), np.float32)
    m[rows, cols] = w_np[co.ravel(), ci.ravel(), dk.ravel()]
    return jnp.asarray(m)


# ----------------------------------------------------------------------------
# Pallas kernel: full ResidualTCN forward for one lane-packed batch group
# ----------------------------------------------------------------------------
def residual_tcn_kernel(x_ref, m_ref, bc_ref, wf_ref, bf_ref, out_ref):
    # x_ref : (in_chan*T, L) f32      lanes L = Bt * in_dim (dense, 128-wide)
    # m_ref : (out_chan*t_conv, in_chan*T - 1) bf16   pooled-conv band matrix
    # bc_ref: (out_chan*t_conv, 1) f32                conv bias (per row)
    # wf_ref: (out_dim, out_chan*t_conv) bf16         fc weight
    # bf_ref: (out_dim, 1) f32                        fc bias
    # out   : (out_dim, L) f32
    x = x_ref[...]

    # MaxPool2d([2,1],[2,1]): adjacent-row max on the VPU; the stride-2
    # subsampling is already folded into the band-matrix columns.
    z = jnp.maximum(x[:-1, :], x[1:, :])

    # Conv2d([K_CONV,1]) on the pooled signal as one band matmul (MXU, bf16 in,
    # f32 accumulate) + bias + ReLU.
    h = jnp.dot(m_ref[...], z.astype(jnp.bfloat16),
                preferred_element_type=jnp.float32)
    h = jnp.maximum(h + bc_ref[...], 0.0)

    # Linear over the (channel-major) flattened conv features; independent per
    # lane column, so batch-lane packing needs no changes here.
    o = jnp.dot(wf_ref[...], h.astype(jnp.bfloat16),
                preferred_element_type=jnp.float32)
    out_ref[...] = o + bf_ref[...]


def residual_tcn_forward(x, params, out_dim, out_chan):
    """x: (B, in_chan, time_len, in_dim) float32.  Returns (B, in_dim, out_dim)."""
    assert K_POOL == 2 and S_POOL == 2, "adjacent-max pool trick assumes 2/2 pooling"
    B, in_chan, time_len, in_dim = x.shape
    t_pool = (time_len - K_POOL) // S_POOL + 1
    t_conv = (t_pool - K_CONV) // S_CONV + 1

    # ---- consolidated constant operands (bf16 weights, f32 biases) ----------
    m = pooled_conv_band_matrix(params["conv_w"], time_len).astype(jnp.bfloat16)
    bc = jnp.repeat(params["conv_b"], t_conv)[:, None].astype(jnp.float32)
    wf = params["fc_w"].astype(jnp.bfloat16)
    bf = params["fc_b"][:, None].astype(jnp.float32)

    # ---- pack batch elements into the lane axis ------------------------------
    bt = max(1, -(-LANE_TARGET // in_dim))          # ceil(128 / in_dim)
    b_pad = -(-B // bt) * bt
    if b_pad != B:
        x = jnp.pad(x, ((0, b_pad - B), (0, 0), (0, 0), (0, 0)))
    g = b_pad // bt
    lanes = bt * in_dim
    rows_in = in_chan * time_len
    x_packed = (x.reshape(g, bt, in_chan, time_len, in_dim)
                  .transpose(0, 2, 3, 1, 4)          # (g, C, T, bt, D)
                  .reshape(g, rows_in, lanes)
                  .astype(jnp.float32))

    const2d = lambda a: pl.BlockSpec(a.shape, lambda i: (0, 0))

    out = pl.pallas_call(
        residual_tcn_kernel,
        out_shape=jax.ShapeDtypeStruct((g, out_dim, lanes), jnp.float32),
        grid=(g,),
        in_specs=[pl.BlockSpec((None, rows_in, lanes), lambda i: (i, 0, 0)),
                  const2d(m), const2d(bc), const2d(wf), const2d(bf)],
        out_specs=pl.BlockSpec((None, out_dim, lanes), lambda i: (i, 0, 0)),
        compiler_params=pltpu.CompilerParams(
            dimension_semantics=("parallel",),        # batch groups -> both TCs on v7x
            vmem_limit_bytes=32 * 1024 * 1024),
    )(x_packed, m, bc, wf, bf)

    # ---- un-pack lanes back to (B, in_dim, out_dim) ---------------------------
    out = (out.reshape(g, out_dim, bt, in_dim)
              .transpose(0, 2, 3, 1)                  # (g, bt, D, out_dim)
              .reshape(b_pad, in_dim, out_dim))
    return out[:B]


# ----------------------------------------------------------------------------
# Pure-JAX reference mirroring the PyTorch ResidualTCN.forward exactly
# ----------------------------------------------------------------------------
def reference_forward(x, params):
    B, in_chan, time_len, in_dim = x.shape
    pooled = jax.lax.reduce_window(x, -jnp.inf, jax.lax.max,
                                   (1, 1, K_POOL, 1), (1, 1, S_POOL, 1), "VALID")
    y = jax.lax.conv_general_dilated(
        pooled, params["conv_w"][:, :, :, None], (S_CONV, 1), "VALID",
        dimension_numbers=("NCHW", "OIHW", "NCHW"))
    y = y + params["conv_b"][None, :, None, None]
    y = jax.nn.relu(y)
    y = jnp.transpose(y, (0, 3, 1, 2)).reshape(B, in_dim, -1)   # permute + view
    return y @ params["fc_w"].T + params["fc_b"]


if __name__ == "__main__":
    B, in_chan, time_len, in_dim = 32, 2, 16, 8
    out_chan, out_dim = 6, 16

    key = jax.random.PRNGKey(0)
    kx, kp = jax.random.split(key)
    x = jax.random.normal(kx, (B, in_chan, time_len, in_dim), jnp.float32)
    params = init_params(kp, time_len, out_dim, in_chan, out_chan)

    out = residual_tcn_forward(x, params, out_dim, out_chan)
    out = jax.block_until_ready(out)

    ref = reference_forward(x, params)
    assert out.shape == ref.shape == (B, in_dim, out_dim), (out.shape, ref.shape)
    err = float(jnp.max(jnp.abs(out - ref)))
    assert err < 2e-2, f"max abs error {err}"   # bf16 MXU inputs, f32 accumulation
    print("KERNEL_OK")
</pallas_src>

<mosaic_0001>
module attributes {stable_mosaic.version = 11 : i64} {
  func.func @residual_tcn_kernel(%arg0: i32, %arg1: memref<1x32x128xf32, #tpu.memory_space<vmem>>, %arg2: memref<24x31xbf16, #tpu.memory_space<vmem>>, %arg3: memref<24x1xf32, #tpu.memory_space<vmem>>, %arg4: memref<16x24xbf16, #tpu.memory_space<vmem>>, %arg5: memref<16x1xf32, #tpu.memory_space<vmem>>, %arg6: memref<1x16x128xf32, #tpu.memory_space<vmem>>) attributes {dimension_semantics = [#tpu.dimension_semantics<parallel>], iteration_bounds = array<i64: 2>, scalar_prefetch = 0 : i64, scratch_operands = 0 : i64, tpu.core_type = #tpu.core_type<tc>, window_params = [{transform_indices = @transform_0, window_bounds = array<i64: 1, 32, 128>}, {pipeline_mode = #tpu.pipeline_mode<synchronous>, transform_indices = @transform_1, window_bounds = array<i64: 24, 31>}, {pipeline_mode = #tpu.pipeline_mode<synchronous>, transform_indices = @transform_2, window_bounds = array<i64: 24, 1>}, {pipeline_mode = #tpu.pipeline_mode<synchronous>, transform_indices = @transform_3, window_bounds = array<i64: 16, 24>}, {pipeline_mode = #tpu.pipeline_mode<synchronous>, transform_indices = @transform_4, window_bounds = array<i64: 16, 1>}, {transform_indices = @transform_5, window_bounds = array<i64: 1, 16, 128>}]} {
    %c0 = arith.constant 0 : index
    %c0_0 = arith.constant 0 : index
    %c0_1 = arith.constant 0 : index
    %0 = vector.load %arg1[%c0, %c0_0, %c0_1] : memref<1x32x128xf32, #tpu.memory_space<vmem>>, vector<1x32x128xf32>
    %1 = vector.shape_cast %0 : vector<1x32x128xf32> to vector<32x128xf32>
    %2 = vector.extract_strided_slice %1 {offsets = [0, 0], sizes = [31, 128], strides = [1, 1]} : vector<32x128xf32> to vector<31x128xf32>
    %3 = vector.extract_strided_slice %1 {offsets = [1, 0], sizes = [31, 128], strides = [1, 1]} : vector<32x128xf32> to vector<31x128xf32>
    %4 = arith.maximumf %2, %3 : vector<31x128xf32>
    %c0_2 = arith.constant 0 : index
    %c0_3 = arith.constant 0 : index
    %5 = vector.load %arg2[%c0_2, %c0_3] : memref<24x31xbf16, #tpu.memory_space<vmem>>, vector<24x31xbf16>
    %6 = arith.truncf %4 : vector<31x128xf32> to vector<31x128xbf16>
    %cst = arith.constant dense<0.000000e+00> : vector<24x128xf32>
    %7 = tpu.matmul %5, %6, %cst {dimension_numbers = #tpu.dot_dimension_numbers<[1], [0], [0], [1], [0, 0, 1, 1], [], []>} : vector<24x31xbf16>, vector<31x128xbf16>, vector<24x128xf32> -> vector<24x128xf32>
    %c0_4 = arith.constant 0 : index
    %c0_5 = arith.constant 0 : index
    %8 = vector.load %arg3[%c0_4, %c0_5] : memref<24x1xf32, #tpu.memory_space<vmem>>, vector<24x1xf32>
    %9 = vector.broadcast %8 : vector<24x1xf32> to vector<24x128xf32>
    %10 = arith.addf %7, %9 : vector<24x128xf32>
    %cst_6 = arith.constant 0.000000e+00 : f32
    %11 = vector.broadcast %cst_6 : f32 to vector<24x128xf32>
    %12 = arith.maximumf %10, %11 : vector<24x128xf32>
    %c0_7 = arith.constant 0 : index
    %c0_8 = arith.constant 0 : index
    %13 = vector.load %arg4[%c0_7, %c0_8] : memref<16x24xbf16, #tpu.memory_space<vmem>>, vector<16x24xbf16>
    %14 = arith.truncf %12 : vector<24x128xf32> to vector<24x128xbf16>
    %cst_9 = arith.constant dense<0.000000e+00> : vector<16x128xf32>
    %15 = tpu.matmul %13, %14, %cst_9 {dimension_numbers = #tpu.dot_dimension_numbers<[1], [0], [0], [1], [0, 0, 1, 1], [], []>} : vector<16x24xbf16>, vector<24x128xbf16>, vector<16x128xf32> -> vector<16x128xf32>
    %c0_10 = arith.constant 0 : index
    %c0_11 = arith.constant 0 : index
    %16 = vector.load %arg5[%c0_10, %c0_11] : memref<16x1xf32, #tpu.memory_space<vmem>>, vector<16x1xf32>
    %17 = vector.broadcast %16 : vector<16x1xf32> to vector<16x128xf32>
    %18 = arith.addf %15, %17 : vector<16x128xf32>
    %c0_12 = arith.constant 0 : index
    %c0_13 = arith.constant 0 : index
    %c0_14 = arith.constant 0 : index
    %19 = vector.load %arg6[%c0_12, %c0_13, %c0_14] : memref<1x16x128xf32, #tpu.memory_space<vmem>>, vector<1x16x128xf32>
    %20 = vector.shape_cast %19 : vector<1x16x128xf32> to vector<16x128xf32>
    %21 = vector.shape_cast %18 : vector<16x128xf32> to vector<1x16x128xf32>
    tpu.vector_store %arg6[%c0_12, %c0_13, %c0_14], %21 {strides = array<i32>} : memref<1x16x128xf32, #tpu.memory_space<vmem>>, vector<1x16x128xf32>,
    return
  }
  func.func @transform_0(%arg0: i32) -> (i32, i32, i32) {
    %c0_i32 = arith.constant 0 : i32
    %c0_i32_0 = arith.constant 0 : i32
    %c0_i32_1 = arith.constant 0 : i32
    return %arg0, %c0_i32, %c0_i32_0 : i32, i32, i32
  }
  func.func @transform_1(%arg0: i32) -> (i32, i32) {
    %c0_i32 = arith.constant 0 : i32
    %c0_i32_0 = arith.constant 0 : i32
    %c0_i32_1 = arith.constant 0 : i32
    return %c0_i32, %c0_i32_0 : i32, i32
  }
  func.func @transform_2(%arg0: i32) -> (i32, i32) {
    %c0_i32 = arith.constant 0 : i32
    %c0_i32_0 = arith.constant 0 : i32
    %c0_i32_1 = arith.constant 0 : i32
    return %c0_i32, %c0_i32_0 : i32, i32
  }
  func.func @transform_3(%arg0: i32) -> (i32, i32) {
    %c0_i32 = arith.constant 0 : i32
    %c0_i32_0 = arith.constant 0 : i32
    %c0_i32_1 = arith.constant 0 : i32
    return %c0_i32, %c0_i32_0 : i32, i32
  }
  func.func @transform_4(%arg0: i32) -> (i32, i32) {
    %c0_i32 = arith.constant 0 : i32
    %c0_i32_0 = arith.constant 0 : i32
    %c0_i32_1 = arith.constant 0 : i32
    return %c0_i32, %c0_i32_0 : i32, i32
  }
  func.func @transform_5(%arg0: i32) -> (i32, i32, i32) {
    %c0_i32 = arith.constant 0 : i32
    %c0_i32_0 = arith.constant 0 : i32
    %c0_i32_1 = arith.constant 0 : i32
    return %arg0, %c0_i32, %c0_i32_0 : i32, i32, i32
  }
}

</mosaic_0001>

<llo_original>
// kernel: tpu_custom_call.1
$region0: #{tpu_custom_call.1}
  #allocation0 [shape = 'u32[]', space=smem, size = 0x4, offset = 0x4, fixed_abs, tag = 'smem constant byte address 0x4 - core index']
  #allocation1 [shape = 'u32[144,128]{1,0:T(1,128)}', space=vmem, size = 0x12000, scoped, tag = 'internal scratch']
  %s0 = inlined_call_operand.hbm [shape: f32[2,32,128], index: 0, kind: input, shape index: {}]
  %s1 = inlined_call_operand.vmem [shape: bf16[24,31], index: 1, kind: input, shape index: {}]
  %s2 = inlined_call_operand.vmem [shape: f32[24,1], index: 2, kind: input, shape index: {}]
  %s3 = inlined_call_operand.vmem [shape: bf16[16,24], index: 3, kind: input, shape index: {}]
  %s4 = inlined_call_operand.vmem [shape: f32[16,1], index: 4, kind: input, shape index: {}]
  %s5 = inlined_call_operand.hbm [shape: f32[2,16,128], index: 5, kind: output, shape index: {}]
  %s6 = sld [smem:[#allocation0]]
  $region57: #{tpu_custom_call.1} parent=0
    _
  %s8 = ssub.s32 1, %s6
  %s9 = scalar_select 0, %s8, %s6
  $region1: #{tpu_custom_call.1} parent=0
    #allocation2 [shape = 'u8[32768]{0}', space=vmem, size = 0x8000, scoped, tag = 'input window, operand 0']
    #allocation3 [shape = 's32[2]{0}', space=sflag, size = 0x8, scoped, tag = 'scoped memory for tpu_custom_call.1']
    #allocation4 [shape = 's32[2]{0}', space=sflag, size = 0x8, scoped, tag = 'scoped memory for tpu_custom_call.1']
    #allocation5 [shape = 'u8[16384]{0}', space=vmem, size = 0x4000, scoped, tag = 'output window, operand 0']
    %10 = vsyncpa [#allocation3], 0
    %s11 = scalar_lea.sflag [#allocation3], 1
    %12 = vsyncpa %s11, 0
    %13 = vsyncpa [#allocation4], 0
    %s14 = scalar_lea.sflag [#allocation4], 1
    %15 = vsyncpa %s14, 0
    loop: start=0, step=1, limit=4
    $region2: #{tpu_custom_call.1} parent=1 // loop_pre_header
      _
    $region3: #{tpu_custom_call.1} parent=1 // loop_header
      %s17 = sphi 0, %s21
      %p18 = scmp.ge.s32.totalorder %s17, 4
      %s27 = sphi 0, %s29
      %s30 = sphi 0, %s27
      %s31 = sphi 0, %s30
      %s47 = sphi 0, %s31
      %s51 = sphi 0, %s51
      %s53 = sphi 0, %s51
      %s54 = sphi 0, %s53
      %s68 = sphi 0, %s54
      %s72 = sphi 0, %s72
      %s74 = sphi 0, %s72
      %s75 = sphi 0, %s74
      %s89 = sphi 0, %s75
      %s93 = sphi 0, %s93
      %s95 = sphi 0, %s93
      %s96 = sphi 0, %s95
      %s110 = sphi 0, %s96
      %s114 = sphi 0, %s114
      %s116 = sphi 0, %s114
      %s117 = sphi 0, %s116
      %s131 = sphi 0, %s117
      %s137 = sphi 0, %s139
      %s140 = sphi 0, %s137
      %s141 = sphi 0, %s140
      %s157 = sphi 0, %s141
    $region4: #{tpu_custom_call.1} parent=1 // loop_header_branch
      %20 = sbr.rel (%p18) target = $region8
    $region5: #{tpu_custom_call.1} parent=1 // loop_body
      %s22 = ssub.s32 %s17, 1
      %s23 = ssub.s32 %s17, 2
      %s24 = sadd.s32 %s17, 1
      %s25 = ssub.s32 %s17, %s24
      %p26 = scmp.eq.s32.totalorder %s25, 0
      %s28 = sadd.s32 %s27, 1
      %s29 = scalar_select %p26, %s27, %s28
      %p32 = pneg %p26
      %p33 = scmp.eq.s32.totalorder %s17, 1
      %p34 = por %p32, %p33
      %p35 = scmp.ne.s32.totalorder %s27, %s30
      %p36 = scmp.eq.s32.totalorder %s17, 0
      %p37 = por %p35, %p36
      %p38 = scmp.ne.s32.totalorder %s27, %s30
      %p39 = scmp.eq.s32.totalorder %s22, 1
      %p40 = por %p38, %p39
      %p41 = scmp.ne.s32.totalorder %s30, %s31
      %p42 = scmp.eq.s32.totalorder %s22, 0
      %p43 = por %p41, %p42
      %p44 = scmp.ne.s32.totalorder %s30, %s31
      %p45 = scmp.eq.s32.totalorder %s23, 1
      %p46 = por %p44, %p45
      %p48 = scmp.ne.s32.totalorder %s31, %s47
      %p49 = scmp.eq.s32.totalorder %s23, 0
      %p50 = por %p48, %p49
      %s52 = sadd.s32 %s51, 1
      %p55 = scmp.eq.s32.totalorder %s17, 1
      %p56 = scmp.ne.s32.totalorder %s51, %s53
      %p57 = scmp.eq.s32.totalorder %s17, 0
      %p58 = por %p56, %p57
      %p59 = scmp.ne.s32.totalorder %s51, %s53
      %p60 = scmp.eq.s32.totalorder %s22, 1
      %p61 = por %p59, %p60
      %p62 = scmp.ne.s32.totalorder %s53, %s54
      %p63 = scmp.eq.s32.totalorder %s22, 0
      %p64 = por %p62, %p63
      %p65 = scmp.ne.s32.totalorder %s53, %s54
      %p66 = scmp.eq.s32.totalorder %s23, 1
      %p67 = por %p65, %p66
      %p69 = scmp.ne.s32.totalorder %s54, %s68
      %p70 = scmp.eq.s32.totalorder %s23, 0
      %p71 = por %p69, %p70
      %s73 = sadd.s32 %s72, 1
      %p76 = scmp.eq.s32.totalorder %s17, 1
      %p77 = scmp.ne.s32.totalorder %s72, %s74
      %p78 = scmp.eq.s32.totalorder %s17, 0
      %p79 = por %p77, %p78
      %p80 = scmp.ne.s32.totalorder %s72, %s74
      %p81 = scmp.eq.s32.totalorder %s22, 1
      %p82 = por %p80, %p81
      %p83 = scmp.ne.s32.totalorder %s74, %s75
      %p84 = scmp.eq.s32.totalorder %s22, 0
      %p85 = por %p83, %p84
      %p86 = scmp.ne.s32.totalorder %s74, %s75
      %p87 = scmp.eq.s32.totalorder %s23, 1
      %p88 = por %p86, %p87
      %p90 = scmp.ne.s32.totalorder %s75, %s89
      %p91 = scmp.eq.s32.totalorder %s23, 0
      %p92 = por %p90, %p91
      %s94 = sadd.s32 %s93, 1
      %p97 = scmp.eq.s32.totalorder %s17, 1
      %p98 = scmp.ne.s32.totalorder %s93, %s95
      %p99 = scmp.eq.s32.totalorder %s17, 0
      %p100 = por %p98, %p99
      %p101 = scmp.ne.s32.totalorder %s93, %s95
      %p102 = scmp.eq.s32.totalorder %s22, 1
      %p103 = por %p101, %p102
      %p104 = scmp.ne.s32.totalorder %s95, %s96
      %p105 = scmp.eq.s32.totalorder %s22, 0
      %p106 = por %p104, %p105
      %p107 = scmp.ne.s32.totalorder %s95, %s96
      %p108 = scmp.eq.s32.totalorder %s23, 1
      %p109 = por %p107, %p108
      %p111 = scmp.ne.s32.totalorder %s96, %s110
      %p112 = scmp.eq.s32.totalorder %s23, 0
      %p113 = por %p111, %p112
      %s115 = sadd.s32 %s114, 1
      %p118 = scmp.eq.s32.totalorder %s17, 1
      %p119 = scmp.ne.s32.totalorder %s114, %s116
      %p120 = scmp.eq.s32.totalorder %s17, 0
      %p121 = por %p119, %p120
      %p122 = scmp.ne.s32.totalorder %s114, %s116
      %p123 = scmp.eq.s32.totalorder %s22, 1
      %p124 = por %p122, %p123
      %p125 = scmp.ne.s32.totalorder %s116, %s117
      %p126 = scmp.eq.s32.totalorder %s22, 0
      %p127 = por %p125, %p126
      %p128 = scmp.ne.s32.totalorder %s116, %s117
      %p129 = scmp.eq.s32.totalorder %s23, 1
      %p130 = por %p128, %p129
      %p132 = scmp.ne.s32.totalorder %s117, %s131
      %p133 = scmp.eq.s32.totalorder %s23, 0
      %p134 = por %p132, %p133
      %s135 = ssub.s32 %s17, %s24
      %p136 = scmp.eq.s32.totalorder %s135, 0
      %s138 = sadd.s32 %s137, 1
      %s139 = scalar_select %p136, %s137, %s138
      %p142 = pneg %p136
      %p143 = scmp.eq.s32.totalorder %s17, 1
      %p144 = por %p142, %p143
      %p145 = scmp.ne.s32.totalorder %s137, %s140
      %p146 = scmp.eq.s32.totalorder %s17, 0
      %p147 = por %p145, %p146
      %p148 = scmp.ne.s32.totalorder %s137, %s140
      %p149 = scmp.eq.s32.totalorder %s22, 1
      %p150 = por %p148, %p149
      %p151 = scmp.ne.s32.totalorder %s140, %s141
      %p152 = scmp.eq.s32.totalorder %s22, 0
      %p153 = por %p151, %p152
      %p154 = scmp.ne.s32.totalorder %s140, %s141
      %p155 = scmp.eq.s32.totalorder %s23, 1
      %p156 = por %p154, %p155
      %p158 = scmp.ne.s32.totalorder %s141, %s157
      %p159 = scmp.eq.s32.totalorder %s23, 0
      %p160 = por %p158, %p159
      %p161 = scmp.le.s32.totalorder 1, %s17
      %p162 = scmp.lt.s32.totalorder %s17, 3
      %p163 = pnand %p161, %p162
      %p164 = pneg %p163
      // Predicated region
      $region9: #{tpu_custom_call.1} parent=5 // pred_check
        _
      $region10: #{tpu_custom_call.1} parent=5 // pred_check_branch
        %166 = sbr.rel (%p163) target = $region12
      $region11: #{tpu_custom_call.1} parent=5 // pred_region
        %s167 = ssub.s32 %s17, 1
        // Predicated region
        $region13: #{tpu_custom_call.1} parent=11 // pred_check
          %p168 = pneg %p64
        $region14: #{tpu_custom_call.1} parent=11 // pred_check_branch
          %170 = sbr.rel (%p168) target = $region16
        $region15: #{tpu_custom_call.1} parent=11 // pred_region
          _
        $region16: #{tpu_custom_call.1} parent=11 // pred_fallthru
          _
        // Predicated region
        $region17: #{tpu_custom_call.1} parent=11 // pred_check
          %p171 = pneg %p85
        $region18: #{tpu_custom_call.1} parent=11 // pred_check_branch
          %173 = sbr.rel (%p171) target = $region20
        $region19: #{tpu_custom_call.1} parent=11 // pred_region
          _
        $region20: #{tpu_custom_call.1} parent=11 // pred_fallthru
          _
        // Predicated region
        $region21: #{tpu_custom_call.1} parent=11 // pred_check
          %p174 = pneg %p106
        $region22: #{tpu_custom_call.1} parent=11 // pred_check_branch
          %176 = sbr.rel (%p174) target = $region24
        $region23: #{tpu_custom_call.1} parent=11 // pred_region
          _
        $region24: #{tpu_custom_call.1} parent=11 // pred_fallthru
          _
        // Predicated region
        $region25: #{tpu_custom_call.1} parent=11 // pred_check
          %p177 = pneg %p127
        $region26: #{tpu_custom_call.1} parent=11 // pred_check_branch
          %179 = sbr.rel (%p177) target = $region28
        $region27: #{tpu_custom_call.1} parent=11 // pred_region
          _
        $region28: #{tpu_custom_call.1} parent=11 // pred_fallthru
          _
      $region12: #{tpu_custom_call.1} parent=5 // pred_fallthru
        _
      %p180 = scmp.lt.s32.totalorder %s17, 2
      // Predicated region
      $region29: #{tpu_custom_call.1} parent=5 // pred_check
        %p181 = pneg %p180
      $region30: #{tpu_custom_call.1} parent=5 // pred_check_branch
        %183 = sbr.rel (%p181) target = $region32
      $region31: #{tpu_custom_call.1} parent=5 // pred_region
        // Predicated region
        $region33: #{tpu_custom_call.1} parent=31 // pred_check
          %p184 = pneg %p37
        $region34: #{tpu_custom_call.1} parent=31 // pred_check_branch
          %186 = sbr.rel (%p184) target = $region36
        $region35: #{tpu_custom_call.1} parent=31 // pred_region
          %s187 = sand.u32 %s27, 1
          %s188 = scalar_lea.sflag [#allocation3], %s187
          %s189 = sand.u32 %s27, 1
          %s190 = smul.addr %s189, 32
          %s191 = scalar_lea.vmem [#allocation2], %s190
          %s193 = ssub.s32 512, 512
          %194 = vsyncadd %s188, %s193
          %s195 = smul.addr %s17, 4
          %s196 = smul.addr %s195, 128
          %s197 = scalar_lea.hbm %s0, %s196
          %s198 = sshll.u32 %s191, 4
          %s199 = int_to_ptr.vmem [resolvable:$true] %s198
          %204 = dma.hbm_to_vmem [thread:$0]  %s197, 512, %s199, %s188, 128, 128, 8
        $region36: #{tpu_custom_call.1} parent=31 // pred_fallthru
          _
      $region32: #{tpu_custom_call.1} parent=5 // pred_fallthru
        _
      %p205 = scmp.le.s32.totalorder 1, %s17
      %p206 = scmp.lt.s32.totalorder %s17, 3
      %p207 = pnand %p205, %p206
      %p208 = pneg %p207
      // Predicated region
      $region37: #{tpu_custom_call.1} parent=5 // pred_check
        _
      $region38: #{tpu_custom_call.1} parent=5 // pred_check_branch
        %210 = sbr.rel (%p207) target = $region40
      $region39: #{tpu_custom_call.1} parent=5 // pred_region
        %s211 = ssub.s32 %s17, 1
        %s212 = sand.u32 %s30, 1
        %s213 = scalar_lea.sflag [#allocation3], %s212
        %s214 = sand.u32 %s30, 1
        %s215 = smul.addr %s214, 32
        %s216 = scalar_lea.vmem [#allocation2], %s215
        // Predicated region
        $region41: #{tpu_custom_call.1} parent=39 // pred_check
          %p217 = pneg %p43
        $region42: #{tpu_custom_call.1} parent=39 // pred_check_branch
          %219 = sbr.rel (%p217) target = $region44
        $region43: #{tpu_custom_call.1} parent=39 // pred_region
          %220 = dma.done %s213, 512
        $region44: #{tpu_custom_call.1} parent=39 // pred_fallthru
          _
        %s221 = sand.u32 %s30, 1
        %s222 = scalar_lea.sflag [#allocation3], %s221
        %s223 = sand.u32 %s30, 1
        %s224 = smul.addr %s223, 32
        %s225 = scalar_lea.vmem [#allocation2], %s224
        %p226 = pneg %p43
        %p227 = pneg %p40
        %p228 = pneg %p64
        %p229 = pneg %p61
        %p230 = pneg %p85
        %p231 = pneg %p82
        %p232 = pneg %p106
        %p233 = pneg %p103
        %p234 = pneg %p127
        %p235 = pneg %p124
        %p236 = pneg %p153
        %p237 = pneg %p150
        %s238 = sand.u32 %s140, 1
        %s239 = scalar_lea.sflag [#allocation4], %s238
        %s240 = sand.u32 %s140, 1
        %s241 = smul.addr %s240, 16
        %s242 = scalar_lea.vmem [#allocation5], %s241
        %v244 = vld [vmem:[%s216] sm:$0xff]
        %v245 = vld [vmem:[%s216 + $0x8] sm:$0xff]
        %v246 = vld [vmem:[%s216 + $0x10] sm:$0xff]
        %v247 = vld [vmem:[%s216 + $0x18] sm:$0xff]
        %vm252 = vcmask 1046528
        %v253 = vrot.slane %v244, 1
        %v254 = vrot.slane %v245, 1
        %v255 = vsel %vm252, %v253, %v254
        %v256 = vrot.slane %v246, 1
        %v257 = vsel %vm252, %v254, %v256
        %v258 = vrot.slane %v247, 1
        %v259 = vsel %vm252, %v256, %v258
        %v264 = vmax.f32 %v244, %v255
        %v265 = vmax.f32 %v245, %v257
        %v266 = vmax.f32 %v246, %v259
        %v267 = vmax.f32 %v247, %v258
        %v268 = vld [vmem:[%s1] sm:$0xf]
        %v269 = vld [vmem:[%s1 + $0x4] sm:$0xf]
        %v270 = vld [vmem:[%s1 + $0x8] sm:$0xf]
        %v271 = vpack.c.bf16 %v265, %v264
        %v272 = vpack.c.bf16 %v267, %v266
        %v273 = vld [vmem:[%s2] sm:$0xff]
        %v274 = vld [vmem:[%s2 + $0x8] sm:$0xff]
        %v275 = vld [vmem:[%s2 + $0x10] sm:$0xff]
        %277 = vset.pattern.permute.xlu0 0
        %278 = vperm.xlu0 %277, %v273
        %v279 = vpop.permute.xlu0 %278
        %282 = vset.pattern.permute.xlu0 0
        %283 = vperm.xlu0 %282, %v274
        %v284 = vpop.permute.xlu0 %283
        %287 = vset.pattern.permute.xlu0 0
        %288 = vperm.xlu0 %287, %v275
        %v289 = vpop.permute.xlu0 %288
        %v294 = vunpack.c.l.b16 %v268
        %v295 = vunpack.c.l.b16 %v269
        %v296 = vunpack.c.l.b16 %v270
        %v297 = vpack.c.b16 %v295, %v294
        %v298 = vpack.c.b16 %v296, %v296
        %vm299 = vcmask 252928
        %v301 = vsel %vm299, %v297, 0
        %v304 = vsel %vm299, %v298, 0
        %vm306 = vcmask 1047552
        %v307 = vsel %vm252, 4294967295, 65535
        %v308 = vsel %vm306, %v307, 0
        %v310 = vand.u32 %v272, %v308
        %312 = vmatprep.subr.bf16.mxu0 0
        %313 = vmatpush1.bf16.msra.mxu0 0
        %314 = vmatprep.subr.bf16.mxu0 0
        %315 = vmatpush1.bf16.msra.mxu0 0
        %316 = vmatprep.subr.bf16.mxu0 0
        %317 = vmatpush1.bf16.msra.mxu0 0
        %318 = vmatprep.subr.bf16.mxu0 0
        %319 = vmatpush1.bf16.msra.mxu0 0
        %320 = vmatprep.subr.bf16.mxu0 0
        %321 = vmatpush1.bf16.msra.mxu0 0
        %322 = vmatprep.subr.bf16.mxu0 0
        %323 = vmatpush1.bf16.msra.mxu0 0
        %324 = vmatprep.subr.bf16.mxu0 0
        %325 = vmatpush1.bf16.msra.mxu0 %v310
        %326 = vmatprep.subr.bf16.mxu0 0
        %327 = vmatpush1.bf16.msra.mxu0 %v271
        %328 = vmatprep.subr.bf16.mxu0 0
        %329 = vmatpush2.bf16.msra.mxu0 0
        %330 = vmatprep.subr.bf16.mxu0 0
        %331 = vmatpush2.bf16.msra.mxu0 0
        %332 = vmatprep.subr.bf16.mxu0 0
        %333 = vmatpush2.bf16.msra.mxu0 0
        %334 = vmatprep.subr.bf16.mxu0 0
        %335 = vmatpush2.bf16.msra.mxu0 0
        %336 = vmatprep.subr.bf16.mxu0 0
        %337 = vmatpush2.bf16.msra.mxu0 0
        %338 = vmatprep.subr.bf16.mxu0 0
        %339 = vmatpush2.bf16.msra.mxu0 0
        %340 = vmatprep.subr.bf16.mxu0 0
        %341 = vmatpush2.bf16.msra.mxu0 0
        %342 = vmatprep.subr.bf16.mxu0 0
        %343 = vmatpush2.bf16.msra.mxu0 0
        %344 = vmatprep.mubr.bf16.mxu0 0
        %345 = vmatmul.mubr.bf16.gmra.mxu0 %v301
        %v346 = vpop.f32.mrf.mxu0
        %v347 = vadd.f32 %v279, %v346
        %v348 = vpop.f32.mrf.mxu0
        %v349 = vpop.f32.mrf.mxu0
        %v350 = vadd.f32 %v284, %v349
        %v351 = vpop.f32.mrf.mxu0
        %352 = vmatprep.mubr.bf16.mxu0 0
        %353 = vmatmul.mubr.bf16.gmra.mxu0 %v304
        %v354 = vpop.f32.mrf.mxu0
        %v355 = vadd.f32 %v289, %v354
        %v356 = vpop.f32.mrf.mxu0
        %v357 = vpop.f32.mrf.mxu0
        %v358 = vpop.f32.mrf.mxu0
        %359 = vdwg.mxu0
        %v360 = vmax.f32 %v347, 0.0
        %v361 = vmax.f32 %v350, 0.0
        %v362 = vmax.f32 %v355, 0.0
        %v363 = vld [vmem:[%s3] sm:$0xf]
        %v364 = vld [vmem:[%s3 + $0x4] sm:$0xf]
        %v365 = vpack.c.bf16 %v361, %v360
        %v366 = vpack.c.bf16 %v362, %v362
        %v367 = vld [vmem:[%s4] sm:$0xff]
        %v368 = vld [vmem:[%s4 + $0x8] sm:$0xff]
        %370 = vset.pattern.permute.xlu0 0
        %371 = vperm.xlu0 %370, %v367
        %v372 = vpop.permute.xlu0 %371
        %375 = vset.pattern.permute.xlu0 0
        %376 = vperm.xlu0 %375, %v368
        %v377 = vpop.permute.xlu0 %376
        %v381 = vunpack.c.l.b16 %v363
        %v382 = vunpack.c.l.b16 %v364
        %v383 = vpack.c.b16 %v382, %v381
        %vm384 = vcmask 195584
        %v386 = vsel %vm384, %v383, 0
        %vm388 = vcmask 1043456
        %v390 = vsel %vm388, %v366, 0
        %392 = vmatprep.subr.bf16.mxu0 0
        %393 = vmatpush1.bf16.msra.mxu0 0
        %394 = vmatprep.subr.bf16.mxu0 0
        %395 = vmatpush1.bf16.msra.mxu0 0
        %396 = vmatprep.subr.bf16.mxu0 0
        %397 = vmatpush1.bf16.msra.mxu0 0
        %398 = vmatprep.subr.bf16.mxu0 0
        %399 = vmatpush1.bf16.msra.mxu0 0
        %400 = vmatprep.subr.bf16.mxu0 0
        %401 = vmatpush1.bf16.msra.mxu0 0
        %402 = vmatprep.subr.bf16.mxu0 0
        %403 = vmatpush1.bf16.msra.mxu0 0
        %404 = vmatprep.subr.bf16.mxu0 0
        %405 = vmatpush1.bf16.msra.mxu0 %v390
        %406 = vmatprep.subr.bf16.mxu0 0
        %407 = vmatpush1.bf16.msra.mxu0 %v365
        %408 = vmatprep.subr.bf16.mxu0 0
        %409 = vmatpush2.bf16.msra.mxu0 0
        %410 = vmatprep.subr.bf16.mxu0 0
        %411 = vmatpush2.bf16.msra.mxu0 0
        %412 = vmatprep.subr.bf16.mxu0 0
        %413 = vmatpush2.bf16.msra.mxu0 0
        %414 = vmatprep.subr.bf16.mxu0 0
        %415 = vmatpush2.bf16.msra.mxu0 0
        %416 = vmatprep.subr.bf16.mxu0 0
        %417 = vmatpush2.bf16.msra.mxu0 0
        %418 = vmatprep.subr.bf16.mxu0 0
        %419 = vmatpush2.bf16.msra.mxu0 0
        %420 = vmatprep.subr.bf16.mxu0 0
        %421 = vmatpush2.bf16.msra.mxu0 0
        %422 = vmatprep.subr.bf16.mxu0 0
        %423 = vmatpush2.bf16.msra.mxu0 0
        %424 = vmatprep.mubr.bf16.mxu0 0
        %425 = vmatmul.mubr.bf16.gmra.mxu0 %v386
        %v426 = vpop.f32.mrf.mxu0
        %v427 = vadd.f32 %v372, %v426
        %v428 = vpop.f32.mrf.mxu0
        %v429 = vpop.f32.mrf.mxu0
        %v430 = vadd.f32 %v377, %v429
        %v431 = vpop.f32.mrf.mxu0
        %432 = vdwg.mxu0
        %433 = vst [vmem:[%s242] sm:$0xff] %v427
        %434 = vst [vmem:[%s242 + $0x8] sm:$0xff] %v430
        %s435 = sand.u32 %s140, 1
        %s436 = scalar_lea.sflag [#allocation4], %s435
        %s437 = sand.u32 %s140, 1
        %s438 = smul.addr %s437, 16
        %s439 = scalar_lea.vmem [#allocation5], %s438
        // Predicated region
        $region45: #{tpu_custom_call.1} parent=39 // pred_check
          %p440 = pneg %p150
        $region46: #{tpu_custom_call.1} parent=39 // pred_check_branch
          %442 = sbr.rel (%p440) target = $region48
        $region47: #{tpu_custom_call.1} parent=39 // pred_region
          %s444 = ssub.s32 256, 256
          %445 = vsyncadd %s436, %s444
          %s446 = smul.addr %s22, 2
          %s447 = smul.addr %s446, 128
          %s448 = scalar_lea.hbm %s5, %s447
          %s449 = sshll.u32 %s439, 4
          %s450 = int_to_ptr.vmem [resolvable:$true] %s449
          %455 = dma.vmem_to_hbm [thread:$0]  %s450, 256, %s448, %s436, 128, 128, 8
        $region48: #{tpu_custom_call.1} parent=39 // pred_fallthru
          _
      $region40: #{tpu_custom_call.1} parent=5 // pred_fallthru
        _
      %p456 = scmp.le.s32.totalorder 2, %s17
      // Predicated region
      $region49: #{tpu_custom_call.1} parent=5 // pred_check
        %p457 = pneg %p456
      $region50: #{tpu_custom_call.1} parent=5 // pred_check_branch
        %459 = sbr.rel (%p457) target = $region52
      $region51: #{tpu_custom_call.1} parent=5 // pred_region
        %s460 = ssub.s32 %s17, 2
        // Predicated region
        $region53: #{tpu_custom_call.1} parent=51 // pred_check
          %p461 = pneg %p156
        $region54: #{tpu_custom_call.1} parent=51 // pred_check_branch
          %463 = sbr.rel (%p461) target = $region56
        $region55: #{tpu_custom_call.1} parent=51 // pred_region
          %s464 = sand.u32 %s141, 1
          %s465 = scalar_lea.sflag [#allocation4], %s464
          %s466 = sand.u32 %s141, 1
          %s467 = smul.addr %s466, 16
          %s468 = scalar_lea.vmem [#allocation5], %s467
          %469 = dma.done %s465, 256
        $region56: #{tpu_custom_call.1} parent=51 // pred_fallthru
          _
      $region52: #{tpu_custom_call.1} parent=5 // pred_fallthru
        _
    $region6: #{tpu_custom_call.1} parent=1 // loop_footer
      %s21 = sadd.s32 1, %s17
    $region7: #{tpu_custom_call.1} parent=1 // loop_footer_branch
      %16 = sbr.rel target = $region3
    $region8: #{tpu_custom_call.1} parent=1 // loop_exit
      _
    %470 = vsyncpa [#allocation3], 1
    %s471 = scalar_lea.sflag [#allocation3], 1
    %472 = vsyncpa %s471, 1
    %473 = vsyncpa [#allocation4], 1
    %s474 = scalar_lea.sflag [#allocation4], 1
    %475 = vsyncpa %s474, 1

</llo_original>
